<compile_context>
chip_gen: v5e
topology: v5e:2x2
jax: 0.10.0
libtpu: 0.0.40
codegen_flags: <defaults>
</compile_context>

<pallas_src>
import functools

import jax
import jax.numpy as jnp
from jax.experimental import pallas as pl
from jax.experimental.pallas import tpu as pltpu

EPS = 1e-5


# --------------------------------------------------------------------------
# Fused single-pass kernel: stats + normalize + affine + ReLU in one block.
# --------------------------------------------------------------------------
def bn_relu_fused_kernel(x_ref, gamma_ref, beta_ref, o_ref, *, eps):
    # x_ref/o_ref: (N, Ct, HW); gamma_ref/beta_ref: (1, Ct, 1)
    x = x_ref[...].astype(jnp.float32)                              # (N, Ct, HW)
    mean = jnp.mean(x, axis=(0, 2), keepdims=True)                  # (1, Ct, 1)
    centered = x - mean
    var = jnp.mean(centered * centered, axis=(0, 2), keepdims=True)  # biased var
    scale = gamma_ref[...] * jax.lax.rsqrt(var + eps)               # (1, Ct, 1)
    bias = beta_ref[...] - mean * scale
    o_ref[...] = jnp.maximum(x * scale + bias, 0.0).astype(o_ref.dtype)


def _fused_bn_relu(x3d, gamma3d, beta3d, eps, ct):
    n, c, hw = x3d.shape
    num_ct = c // ct
    return pl.pallas_call(
        functools.partial(bn_relu_fused_kernel, eps=eps),
        out_shape=jax.ShapeDtypeStruct((n, c, hw), x3d.dtype),
        grid_spec=pltpu.PrefetchScalarGridSpec(
            num_scalar_prefetch=0,
            grid=(num_ct,),
            in_specs=[
                pl.BlockSpec((n, ct, hw), lambda ci: (0, ci, 0)),
                pl.BlockSpec((1, ct, 1), lambda ci: (0, ci, 0)),
                pl.BlockSpec((1, ct, 1), lambda ci: (0, ci, 0)),
            ],
            out_specs=pl.BlockSpec((n, ct, hw), lambda ci: (0, ci, 0)),
        ),
        compiler_params=pltpu.CompilerParams(
            dimension_semantics=("parallel",)),
    )(x3d, gamma3d, beta3d)


# --------------------------------------------------------------------------
# Fallback two-phase streaming path (for shapes where a full (N, Ct, HW)
# channel slab does not fit in VMEM): 2 reads + 1 write of x.
# --------------------------------------------------------------------------
def _pick_c_tile_stream(c, max_tile=64):
    """Largest divisor of c that is a multiple of 8 and <= max_tile (else c)."""
    for t in range(min(max_tile, c), 0, -1):
        if c % t == 0 and t % 8 == 0:
            return t
    return c


def bn_stats_kernel(x_ref, gamma_ref, beta_ref, scale_ref, bias_ref,
                    sum_ref, sumsq_ref, *, inv_m, eps):
    # grid = (num_c_tiles, N); x_ref: (Ct, HW); gamma/beta/scale/bias: (Ct, 1)
    ni = pl.program_id(1)

    @pl.when(ni == 0)
    def _():
        sum_ref[...] = jnp.zeros_like(sum_ref)
        sumsq_ref[...] = jnp.zeros_like(sumsq_ref)

    x = x_ref[...].astype(jnp.float32)                        # (Ct, HW)
    sum_ref[...] += jnp.sum(x, axis=1, keepdims=True)         # (Ct, 1)
    sumsq_ref[...] += jnp.sum(x * x, axis=1, keepdims=True)   # (Ct, 1)

    @pl.when(ni == pl.num_programs(1) - 1)
    def _():
        mean = sum_ref[...] * inv_m
        var = jnp.maximum(sumsq_ref[...] * inv_m - mean * mean, 0.0)
        scale = gamma_ref[...] * jax.lax.rsqrt(var + eps)     # (Ct, 1)
        scale_ref[...] = scale
        bias_ref[...] = beta_ref[...] - mean * scale


def bn_apply_kernel(x_ref, scale_ref, bias_ref, o_ref):
    # x_ref/o_ref: (Ct, HW); scale/bias: (Ct, 1) broadcast along the lane axis.
    y = x_ref[...].astype(jnp.float32) * scale_ref[...] + bias_ref[...]
    o_ref[...] = jnp.maximum(y, 0.0).astype(o_ref.dtype)


def _two_phase_bn_relu(x3d, gamma, beta, eps):
    n, c, hw = x3d.shape
    gamma2d = gamma.reshape(c, 1).astype(jnp.float32)
    beta2d = beta.reshape(c, 1).astype(jnp.float32)

    ct = _pick_c_tile_stream(c)
    num_ct = c // ct
    # TODO(synk): for extremely large H*W an additional lane-axis grid dim
    # (with a masked tail) would be needed; not required for this module's shapes.

    scale, bias = pl.pallas_call(
        functools.partial(bn_stats_kernel, inv_m=1.0 / float(n * hw), eps=eps),
        out_shape=(jax.ShapeDtypeStruct((c, 1), jnp.float32),
                   jax.ShapeDtypeStruct((c, 1), jnp.float32)),
        grid_spec=pltpu.PrefetchScalarGridSpec(
            num_scalar_prefetch=0,
            grid=(num_ct, n),
            in_specs=[
                pl.BlockSpec((None, ct, hw), lambda ci, ni: (ni, ci, 0)),
                pl.BlockSpec((ct, 1), lambda ci, ni: (ci, 0)),
                pl.BlockSpec((ct, 1), lambda ci, ni: (ci, 0)),
            ],
            out_specs=[
                pl.BlockSpec((ct, 1), lambda ci, ni: (ci, 0)),
                pl.BlockSpec((ct, 1), lambda ci, ni: (ci, 0)),
            ],
            scratch_shapes=[pltpu.VMEM((ct, 1), jnp.float32),
                            pltpu.VMEM((ct, 1), jnp.float32)],
        ),
        compiler_params=pltpu.CompilerParams(
            dimension_semantics=("parallel", "arbitrary")),
    )(x3d, gamma2d, beta2d)

    return pl.pallas_call(
        bn_apply_kernel,
        out_shape=jax.ShapeDtypeStruct((n, c, hw), x3d.dtype),
        grid_spec=pltpu.PrefetchScalarGridSpec(
            num_scalar_prefetch=0,
            grid=(n, num_ct),
            in_specs=[
                pl.BlockSpec((None, ct, hw), lambda ni, ci: (ni, ci, 0)),
                pl.BlockSpec((ct, 1), lambda ni, ci: (ci, 0)),
                pl.BlockSpec((ct, 1), lambda ni, ci: (ci, 0)),
            ],
            out_specs=pl.BlockSpec((None, ct, hw), lambda ni, ci: (ni, ci, 0)),
        ),
        compiler_params=pltpu.CompilerParams(
            dimension_semantics=("parallel", "parallel")),
    )(x3d, scale, bias)


# --------------------------------------------------------------------------
# Public wrapper: training-mode BatchNorm2d(C) + ReLU on an NCHW tensor.
# --------------------------------------------------------------------------
_FUSED_VMEM_BUDGET = 12 * 1024 * 1024  # conservative vs. default scoped VMEM


def batchnorm_relu(x_nchw, gamma, beta, eps=EPS):
    n, c, h, w = x_nchw.shape
    hw = h * w
    x3d = x_nchw.reshape(n, c, hw)                   # free reshape, no transpose

    # Per-channel footprint of the fused path: double-buffered input + output
    # blocks plus ~2 block-sized f32 compute temporaries.
    elem = jnp.dtype(x_nchw.dtype).itemsize
    bytes_per_channel = n * hw * (4 * elem + 2 * 4)

    ct = None
    for t in range(c, 0, -1):
        if c % t == 0 and (t % 8 == 0 or t == c) \
                and t * bytes_per_channel <= _FUSED_VMEM_BUDGET:
            ct = t
            break

    if ct is not None:
        gamma3d = gamma.reshape(1, c, 1).astype(jnp.float32)
        beta3d = beta.reshape(1, c, 1).astype(jnp.float32)
        out3d = _fused_bn_relu(x3d, gamma3d, beta3d, eps, ct)
    else:
        out3d = _two_phase_bn_relu(x3d, gamma, beta, eps)

    return out3d.reshape(n, c, h, w)                 # free reshape back to NCHW


if __name__ == "__main__":
    # Small shapes consistent with the module: BatchNorm2d(192) fixes C=192;
    # use a reduced spatial extent (module's real input is 1x192x56x56).
    N, C, H, W = 1, 192, 16, 16
    key = jax.random.PRNGKey(0)
    kx, kg, kb = jax.random.split(key, 3)

    # non-zero mean / non-unit variance so the statistics path is exercised
    x = 2.0 * jax.random.normal(kx, (N, C, H, W), dtype=jnp.float32) + 0.5
    gamma = 1.0 + 0.1 * jax.random.normal(kg, (C,), dtype=jnp.float32)
    beta = 0.1 * jax.random.normal(kb, (C,), dtype=jnp.float32)

    out = batchnorm_relu(x, gamma, beta)
    jax.block_until_ready(out)

    # pure-JAX reference (training-mode BN: biased batch variance) + ReLU
    mean = jnp.mean(x, axis=(0, 2, 3), keepdims=True)
    var = jnp.mean((x - mean) ** 2, axis=(0, 2, 3), keepdims=True)
    ref = (x - mean) * jax.lax.rsqrt(var + EPS)
    ref = ref * gamma.reshape(1, C, 1, 1) + beta.reshape(1, C, 1, 1)
    ref = jnp.maximum(ref, 0.0)

    assert out.shape == (N, C, H, W)
    err = float(jnp.max(jnp.abs(out - ref)))
    assert err < 1e-4, f"fused path error {err}"

    # Also exercise the streaming fallback path on the same small data.
    out2 = _two_phase_bn_relu(x.reshape(N, C, H * W), gamma, beta, EPS)
    out2 = jax.block_until_ready(out2).reshape(N, C, H, W)
    err2 = float(jnp.max(jnp.abs(out2 - ref)))
    assert err2 < 1e-4, f"two-phase path error {err2}"

    print("KERNEL_OK")
</pallas_src>

<mosaic_0001>
module attributes {stable_mosaic.version = 11 : i64} {
  func.func @bn_relu_fused_kernel(%arg0: i32, %arg1: memref<1x192x256xf32, #tpu.memory_space<vmem>>, %arg2: memref<1x192x1xf32, #tpu.memory_space<vmem>>, %arg3: memref<1x192x1xf32, #tpu.memory_space<vmem>>, %arg4: memref<1x192x256xf32, #tpu.memory_space<vmem>>) attributes {dimension_semantics = [#tpu.dimension_semantics<parallel>], iteration_bounds = array<i64: 1>, scalar_prefetch = 0 : i64, scratch_operands = 0 : i64, tpu.core_type = #tpu.core_type<tc>, window_params = [{transform_indices = @transform_0, window_bounds = array<i64: 1, 192, 256>}, {transform_indices = @transform_1, window_bounds = array<i64: 1, 192, 1>}, {transform_indices = @transform_2, window_bounds = array<i64: 1, 192, 1>}, {transform_indices = @transform_3, window_bounds = array<i64: 1, 192, 256>}]} {
    %c0 = arith.constant 0 : index
    %c0_0 = arith.constant 0 : index
    %c0_1 = arith.constant 0 : index
    %0 = vector.load %arg1[%c0, %c0_0, %c0_1] : memref<1x192x256xf32, #tpu.memory_space<vmem>>, vector<1x192x256xf32>
    %cst = arith.constant dense<0.000000e+00> : vector<192xf32>
    %1 = vector.multi_reduction <add>, %0, %cst [0, 2] : vector<1x192x256xf32> to vector<192xf32>
    %2 = vector.shape_cast %1 : vector<192xf32> to vector<1x192x1xf32>
    %cst_2 = arith.constant 2.560000e+02 : f32
    %3 = vector.broadcast %cst_2 : f32 to vector<1x192x1xf32>
    %4 = arith.divf %2, %3 : vector<1x192x1xf32>
    %5 = vector.broadcast %4 : vector<1x192x1xf32> to vector<1x192x256xf32>
    %6 = arith.subf %0, %5 : vector<1x192x256xf32>
    %7 = arith.mulf %6, %6 : vector<1x192x256xf32>
    %cst_3 = arith.constant dense<0.000000e+00> : vector<192xf32>
    %8 = vector.multi_reduction <add>, %7, %cst_3 [0, 2] : vector<1x192x256xf32> to vector<192xf32>
    %9 = vector.shape_cast %8 : vector<192xf32> to vector<1x192x1xf32>
    %cst_4 = arith.constant 2.560000e+02 : f32
    %10 = vector.broadcast %cst_4 : f32 to vector<1x192x1xf32>
    %11 = arith.divf %9, %10 : vector<1x192x1xf32>
    %c0_5 = arith.constant 0 : index
    %c0_6 = arith.constant 0 : index
    %c0_7 = arith.constant 0 : index
    %12 = vector.load %arg2[%c0_5, %c0_6, %c0_7] : memref<1x192x1xf32, #tpu.memory_space<vmem>>, vector<1x192x1xf32>
    %cst_8 = arith.constant 9.99999974E-6 : f32
    %13 = vector.broadcast %cst_8 : f32 to vector<1x192x1xf32>
    %14 = arith.addf %11, %13 : vector<1x192x1xf32>
    %15 = math.rsqrt %14 : vector<1x192x1xf32>
    %16 = arith.mulf %12, %15 : vector<1x192x1xf32>
    %c0_9 = arith.constant 0 : index
    %c0_10 = arith.constant 0 : index
    %c0_11 = arith.constant 0 : index
    %17 = vector.load %arg3[%c0_9, %c0_10, %c0_11] : memref<1x192x1xf32, #tpu.memory_space<vmem>>, vector<1x192x1xf32>
    %18 = arith.mulf %4, %16 : vector<1x192x1xf32>
    %19 = arith.subf %17, %18 : vector<1x192x1xf32>
    %20 = vector.broadcast %16 : vector<1x192x1xf32> to vector<1x192x256xf32>
    %21 = arith.mulf %0, %20 : vector<1x192x256xf32>
    %22 = vector.broadcast %19 : vector<1x192x1xf32> to vector<1x192x256xf32>
    %23 = arith.addf %21, %22 : vector<1x192x256xf32>
    %cst_12 = arith.constant 0.000000e+00 : f32
    %24 = vector.broadcast %cst_12 : f32 to vector<1x192x256xf32>
    %25 = arith.maximumf %23, %24 : vector<1x192x256xf32>
    %c0_13 = arith.constant 0 : index
    %c0_14 = arith.constant 0 : index
    %c0_15 = arith.constant 0 : index
    %26 = vector.load %arg4[%c0_13, %c0_14, %c0_15] : memref<1x192x256xf32, #tpu.memory_space<vmem>>, vector<1x192x256xf32>
    tpu.vector_store %arg4[%c0_13, %c0_14, %c0_15], %25 {strides = array<i32>} : memref<1x192x256xf32, #tpu.memory_space<vmem>>, vector<1x192x256xf32>,
    return
  }
  func.func @transform_0(%arg0: i32) -> (i32, i32, i32) {
    %c0_i32 = arith.constant 0 : i32
    %c0_i32_0 = arith.constant 0 : i32
    %c0_i32_1 = arith.constant 0 : i32
    return %c0_i32, %arg0, %c0_i32_0 : i32, i32, i32
  }
  func.func @transform_1(%arg0: i32) -> (i32, i32, i32) {
    %c0_i32 = arith.constant 0 : i32
    %c0_i32_0 = arith.constant 0 : i32
    %c0_i32_1 = arith.constant 0 : i32
    return %c0_i32, %arg0, %c0_i32_0 : i32, i32, i32
  }
  func.func @transform_2(%arg0: i32) -> (i32, i32, i32) {
    %c0_i32 = arith.constant 0 : i32
    %c0_i32_0 = arith.constant 0 : i32
    %c0_i32_1 = arith.constant 0 : i32
    return %c0_i32, %arg0, %c0_i32_0 : i32, i32, i32
  }
  func.func @transform_3(%arg0: i32) -> (i32, i32, i32) {
    %c0_i32 = arith.constant 0 : i32
    %c0_i32_0 = arith.constant 0 : i32
    %c0_i32_1 = arith.constant 0 : i32
    return %c0_i32, %arg0, %c0_i32_0 : i32, i32, i32
  }
}

</mosaic_0001>

<llo_original>
// kernel: tpu_custom_call.1
$region0: #{tpu_custom_call.1}
  #allocation0 [shape = 'u32[]', space=smem, size = 0x4, offset = 0x4, fixed_abs, tag = 'smem constant byte address 0x4 - core index']
  #allocation1 [shape = 'u32[72,128]{1,0:T(1,128)}', space=vmem, size = 0x9000, scoped, tag = 'internal scratch']
  %s0 = inlined_call_operand.vmem [shape: f32[1,192,256], index: 0, kind: input, shape index: {}]
  %s1 = inlined_call_operand.vmem [shape: f32[1,192,1], index: 1, kind: input, shape index: {}]
  %s2 = inlined_call_operand.vmem [shape: f32[1,192,1], index: 2, kind: input, shape index: {}]
  %s3 = inlined_call_operand.hbm [shape: f32[1,192,256], index: 3, kind: output, shape index: {}]
  %s4 = sld [smem:[#allocation0]]
  $region22: #{tpu_custom_call.1} parent=0
    _
  %s6 = ssub.s32 1, %s4
  %s7 = scalar_select 0, %s6, %s4
  $region1: #{tpu_custom_call.1} parent=0
    #allocation2 [shape = 'u8[196608]{0}', space=vmem, size = 0x30000, scoped, tag = 'output window, operand 0, single buffered']
    #allocation3 [shape = 's32[1]{0}', space=sflag, size = 0x4, scoped, tag = 'scoped memory for tpu_custom_call.1']
    %8 = vsyncpa [#allocation3], 0
    // Predicated region
    $region2: #{tpu_custom_call.1} parent=1 // pred_check
      _
    $region3: #{tpu_custom_call.1} parent=1 // pred_check_branch
      %10 = sbr.rel (0) target = $region5
    $region4: #{tpu_custom_call.1} parent=1 // pred_region
      _
    $region5: #{tpu_custom_call.1} parent=1 // pred_fallthru
      _
    // Predicated region
    $region6: #{tpu_custom_call.1} parent=1 // pred_check
      _
    $region7: #{tpu_custom_call.1} parent=1 // pred_check_branch
      %12 = sbr.rel (0) target = $region9
    $region8: #{tpu_custom_call.1} parent=1 // pred_region
      _
    $region9: #{tpu_custom_call.1} parent=1 // pred_fallthru
      _
    // Predicated region
    $region10: #{tpu_custom_call.1} parent=1 // pred_check
      _
    $region11: #{tpu_custom_call.1} parent=1 // pred_check_branch
      %14 = sbr.rel (0) target = $region13
    $region12: #{tpu_custom_call.1} parent=1 // pred_region
      _
    $region13: #{tpu_custom_call.1} parent=1 // pred_fallthru
      _
    %v15 = vld [vmem:[%s0] sm:$0xff]
    %v16 = vld [vmem:[%s0 + $0x8] sm:$0xff]
    %v17 = vld [vmem:[%s0 + $0x10] sm:$0xff]
    %v18 = vld [vmem:[%s0 + $0x18] sm:$0xff]
    %v19 = vld [vmem:[%s0 + $0x20] sm:$0xff]
    %v20 = vld [vmem:[%s0 + $0x28] sm:$0xff]
    %v21 = vld [vmem:[%s0 + $0x30] sm:$0xff]
    %v22 = vld [vmem:[%s0 + $0x38] sm:$0xff]
    %v23 = vld [vmem:[%s0 + $0x40] sm:$0xff]
    %v24 = vld [vmem:[%s0 + $0x48] sm:$0xff]
    %v25 = vld [vmem:[%s0 + $0x50] sm:$0xff]
    %v26 = vld [vmem:[%s0 + $0x58] sm:$0xff]
    %v27 = vld [vmem:[%s0 + $0x60] sm:$0xff]
    %v28 = vld [vmem:[%s0 + $0x68] sm:$0xff]
    %v29 = vld [vmem:[%s0 + $0x70] sm:$0xff]
    %v30 = vld [vmem:[%s0 + $0x78] sm:$0xff]
    %v31 = vld [vmem:[%s0 + $0x80] sm:$0xff]
    %v32 = vld [vmem:[%s0 + $0x88] sm:$0xff]
    %v33 = vld [vmem:[%s0 + $0x90] sm:$0xff]
    %v34 = vld [vmem:[%s0 + $0x98] sm:$0xff]
    %v35 = vld [vmem:[%s0 + $0xa0] sm:$0xff]
    %v36 = vld [vmem:[%s0 + $0xa8] sm:$0xff]
    %v37 = vld [vmem:[%s0 + $0xb0] sm:$0xff]
    %v38 = vld [vmem:[%s0 + $0xb8] sm:$0xff]
    %v39 = vld [vmem:[%s0 + $0xc0] sm:$0xff]
    %v40 = vld [vmem:[%s0 + $0xc8] sm:$0xff]
    %v41 = vld [vmem:[%s0 + $0xd0] sm:$0xff]
    %v42 = vld [vmem:[%s0 + $0xd8] sm:$0xff]
    %v43 = vld [vmem:[%s0 + $0xe0] sm:$0xff]
    %v44 = vld [vmem:[%s0 + $0xe8] sm:$0xff]
    %v45 = vld [vmem:[%s0 + $0xf0] sm:$0xff]
    %v46 = vld [vmem:[%s0 + $0xf8] sm:$0xff]
    %v47 = vld [vmem:[%s0 + $0x100] sm:$0xff]
    %v48 = vld [vmem:[%s0 + $0x108] sm:$0xff]
    %v49 = vld [vmem:[%s0 + $0x110] sm:$0xff]
    %v50 = vld [vmem:[%s0 + $0x118] sm:$0xff]
    %v51 = vld [vmem:[%s0 + $0x120] sm:$0xff]
    %v52 = vld [vmem:[%s0 + $0x128] sm:$0xff]
    %v53 = vld [vmem:[%s0 + $0x130] sm:$0xff]
    %v54 = vld [vmem:[%s0 + $0x138] sm:$0xff]
    %v55 = vld [vmem:[%s0 + $0x140] sm:$0xff]
    %v56 = vld [vmem:[%s0 + $0x148] sm:$0xff]
    %v57 = vld [vmem:[%s0 + $0x150] sm:$0xff]
    %v58 = vld [vmem:[%s0 + $0x158] sm:$0xff]
    %v59 = vld [vmem:[%s0 + $0x160] sm:$0xff]
    %v60 = vld [vmem:[%s0 + $0x168] sm:$0xff]
    %v61 = vld [vmem:[%s0 + $0x170] sm:$0xff]
    %v62 = vld [vmem:[%s0 + $0x178] sm:$0xff]
    %v63 = vadd.f32 %v15, %v16
    %64 = vadd.xlane.f32.xlu0 %v63
    %v65 = vpop.xlane.xlu0 %64
    %v66 = vadd.f32 %v17, %v18
    %67 = vadd.xlane.f32.xlu0 %v66
    %v68 = vpop.xlane.xlu0 %67
    %v69 = vadd.f32 %v19, %v20
    %70 = vadd.xlane.f32.xlu0 %v69
    %v71 = vpop.xlane.xlu0 %70
    %v72 = vadd.f32 %v21, %v22
    %73 = vadd.xlane.f32.xlu0 %v72
    %v74 = vpop.xlane.xlu0 %73
    %v75 = vadd.f32 %v23, %v24
    %76 = vadd.xlane.f32.xlu0 %v75
    %v77 = vpop.xlane.xlu0 %76
    %v78 = vadd.f32 %v25, %v26
    %79 = vadd.xlane.f32.xlu0 %v78
    %v80 = vpop.xlane.xlu0 %79
    %v81 = vadd.f32 %v27, %v28
    %82 = vadd.xlane.f32.xlu0 %v81
    %v83 = vpop.xlane.xlu0 %82
    %v84 = vadd.f32 %v29, %v30
    %85 = vadd.xlane.f32.xlu0 %v84
    %v86 = vpop.xlane.xlu0 %85
    %v87 = vadd.f32 %v31, %v32
    %88 = vadd.xlane.f32.xlu0 %v87
    %v89 = vpop.xlane.xlu0 %88
    %v90 = vadd.f32 %v33, %v34
    %91 = vadd.xlane.f32.xlu0 %v90
    %v92 = vpop.xlane.xlu0 %91
    %v93 = vadd.f32 %v35, %v36
    %94 = vadd.xlane.f32.xlu0 %v93
    %v95 = vpop.xlane.xlu0 %94
    %v96 = vadd.f32 %v37, %v38
    %97 = vadd.xlane.f32.xlu0 %v96
    %v98 = vpop.xlane.xlu0 %97
    %v99 = vadd.f32 %v39, %v40
    %100 = vadd.xlane.f32.xlu0 %v99
    %v101 = vpop.xlane.xlu0 %100
    %v102 = vadd.f32 %v41, %v42
    %103 = vadd.xlane.f32.xlu0 %v102
    %v104 = vpop.xlane.xlu0 %103
    %v105 = vadd.f32 %v43, %v44
    %106 = vadd.xlane.f32.xlu0 %v105
    %v107 = vpop.xlane.xlu0 %106
    %v108 = vadd.f32 %v45, %v46
    %109 = vadd.xlane.f32.xlu0 %v108
    %v110 = vpop.xlane.xlu0 %109
    %v111 = vadd.f32 %v47, %v48
    %112 = vadd.xlane.f32.xlu0 %v111
    %v113 = vpop.xlane.xlu0 %112
    %v114 = vadd.f32 %v49, %v50
    %115 = vadd.xlane.f32.xlu0 %v114
    %v116 = vpop.xlane.xlu0 %115
    %v117 = vadd.f32 %v51, %v52
    %118 = vadd.xlane.f32.xlu0 %v117
    %v119 = vpop.xlane.xlu0 %118
    %v120 = vadd.f32 %v53, %v54
    %121 = vadd.xlane.f32.xlu0 %v120
    %v122 = vpop.xlane.xlu0 %121
    %v123 = vadd.f32 %v55, %v56
    %124 = vadd.xlane.f32.xlu0 %v123
    %v125 = vpop.xlane.xlu0 %124
    %v126 = vadd.f32 %v57, %v58
    %127 = vadd.xlane.f32.xlu0 %v126
    %v128 = vpop.xlane.xlu0 %127
    %v129 = vadd.f32 %v59, %v60
    %130 = vadd.xlane.f32.xlu0 %v129
    %v131 = vpop.xlane.xlu0 %130
    %v132 = vadd.f32 %v61, %v62
    %133 = vadd.xlane.f32.xlu0 %v132
    %v134 = vpop.xlane.xlu0 %133
    %v135 = vrcp.pop 256.0
    %v136 = vmul.f32 256.0, %v135
    %v137 = vsub.f32 1.0, %v136
    %v138 = vmul.f32 %v135, %v137
    %v139 = vadd.f32 %v135, %v138
    %vm140 = vweird.f32 %v135
    %v141 = vsel %vm140, %v135, %v139
    %v142 = vmul.f32 %v65, %v141
    %v143 = vmul.f32 %v68, %v141
    %v144 = vmul.f32 %v71, %v141
    %v145 = vmul.f32 %v74, %v141
    %v146 = vmul.f32 %v77, %v141
    %v147 = vmul.f32 %v80, %v141
    %v148 = vmul.f32 %v83, %v141
    %v149 = vmul.f32 %v86, %v141
    %v150 = vmul.f32 %v89, %v141
    %v151 = vmul.f32 %v92, %v141
    %v152 = vmul.f32 %v95, %v141
    %v153 = vmul.f32 %v98, %v141
    %v154 = vmul.f32 %v101, %v141
    %v155 = vmul.f32 %v104, %v141
    %v156 = vmul.f32 %v107, %v141
    %v157 = vmul.f32 %v110, %v141
    %v158 = vmul.f32 %v113, %v141
    %v159 = vmul.f32 %v116, %v141
    %v160 = vmul.f32 %v119, %v141
    %v161 = vmul.f32 %v122, %v141
    %v162 = vmul.f32 %v125, %v141
    %v163 = vmul.f32 %v128, %v141
    %v164 = vmul.f32 %v131, %v141
    %v165 = vmul.f32 %v134, %v141
    %v166 = vsub.f32 %v15, %v142
    %v167 = vsub.f32 %v16, %v142
    %v168 = vsub.f32 %v17, %v143
    %v169 = vsub.f32 %v18, %v143
    %v170 = vsub.f32 %v19, %v144
    %v171 = vsub.f32 %v20, %v144
    %v172 = vsub.f32 %v21, %v145
    %v173 = vsub.f32 %v22, %v145
    %v174 = vsub.f32 %v23, %v146
    %v175 = vsub.f32 %v24, %v146
    %v176 = vsub.f32 %v25, %v147
    %v177 = vsub.f32 %v26, %v147
    %v178 = vsub.f32 %v27, %v148
    %v179 = vsub.f32 %v28, %v148
    %v180 = vsub.f32 %v29, %v149
    %v181 = vsub.f32 %v30, %v149
    %v182 = vsub.f32 %v31, %v150
    %v183 = vsub.f32 %v32, %v150
    %v184 = vsub.f32 %v33, %v151
    %v185 = vsub.f32 %v34, %v151
    %v186 = vsub.f32 %v35, %v152
    %v187 = vsub.f32 %v36, %v152
    %v188 = vsub.f32 %v37, %v153
    %v189 = vsub.f32 %v38, %v153
    %v190 = vsub.f32 %v39, %v154
    %v191 = vsub.f32 %v40, %v154
    %v192 = vsub.f32 %v41, %v155
    %v193 = vsub.f32 %v42, %v155
    %v194 = vsub.f32 %v43, %v156
    %v195 = vsub.f32 %v44, %v156
    %v196 = vsub.f32 %v45, %v157
    %v197 = vsub.f32 %v46, %v157
    %v198 = vsub.f32 %v47, %v158
    %v199 = vsub.f32 %v48, %v158
    %v200 = vsub.f32 %v49, %v159
    %v201 = vsub.f32 %v50, %v159
    %v202 = vsub.f32 %v51, %v160
    %v203 = vsub.f32 %v52, %v160
    %v204 = vsub.f32 %v53, %v161
    %v205 = vsub.f32 %v54, %v161
    %v206 = vsub.f32 %v55, %v162
    %v207 = vsub.f32 %v56, %v162
    %v208 = vsub.f32 %v57, %v163
    %v209 = vsub.f32 %v58, %v163
    %v210 = vsub.f32 %v59, %v164
    %v211 = vsub.f32 %v60, %v164
    %v212 = vsub.f32 %v61, %v165
    %v213 = vsub.f32 %v62, %v165
    %v214 = vmul.f32 %v166, %v166
    %v215 = vmul.f32 %v167, %v167
    %v216 = vmul.f32 %v168, %v168
    %v217 = vmul.f32 %v169, %v169
    %v218 = vmul.f32 %v170, %v170
    %v219 = vmul.f32 %v171, %v171
    %v220 = vmul.f32 %v172, %v172
    %v221 = vmul.f32 %v173, %v173
    %v222 = vmul.f32 %v174, %v174
    %v223 = vmul.f32 %v175, %v175
    %v224 = vmul.f32 %v176, %v176
    %v225 = vmul.f32 %v177, %v177
    %v226 = vmul.f32 %v178, %v178
    %v227 = vmul.f32 %v179, %v179
    %v228 = vmul.f32 %v180, %v180
    %v229 = vmul.f32 %v181, %v181
    %v230 = vmul.f32 %v182, %v182
    %v231 = vmul.f32 %v183, %v183
    %v232 = vmul.f32 %v184, %v184
    %v233 = vmul.f32 %v185, %v185
    %v234 = vmul.f32 %v186, %v186
    %v235 = vmul.f32 %v187, %v187
    %v236 = vmul.f32 %v188, %v188
    %v237 = vmul.f32 %v189, %v189
    %v238 = vmul.f32 %v190, %v190
    %v239 = vmul.f32 %v191, %v191
    %v240 = vmul.f32 %v192, %v192
    %v241 = vmul.f32 %v193, %v193
    %v242 = vmul.f32 %v194, %v194
    %v243 = vmul.f32 %v195, %v195
    %v244 = vmul.f32 %v196, %v196
    %v245 = vmul.f32 %v197, %v197
    %v246 = vmul.f32 %v198, %v198
    %v247 = vmul.f32 %v199, %v199
    %v248 = vmul.f32 %v200, %v200
    %v249 = vmul.f32 %v201, %v201
    %v250 = vmul.f32 %v202, %v202
    %v251 = vmul.f32 %v203, %v203
    %v252 = vmul.f32 %v204, %v204
    %v253 = vmul.f32 %v205, %v205
    %v254 = vmul.f32 %v206, %v206
    %v255 = vmul.f32 %v207, %v207
    %v256 = vmul.f32 %v208, %v208
    %v257 = vmul.f32 %v209, %v209
    %v258 = vmul.f32 %v210, %v210
    %v259 = vmul.f32 %v211, %v211
    %v260 = vmul.f32 %v212, %v212
    %v261 = vmul.f32 %v213, %v213
    %v262 = vadd.f32 %v214, %v215
    %263 = vadd.xlane.f32.xlu0 %v262
    %v264 = vpop.xlane.xlu0 %263
    %v265 = vadd.f32 %v216, %v217
    %266 = vadd.xlane.f32.xlu0 %v265
    %v267 = vpop.xlane.xlu0 %266
    %v268 = vadd.f32 %v218, %v219
    %269 = vadd.xlane.f32.xlu0 %v268
    %v270 = vpop.xlane.xlu0 %269
    %v271 = vadd.f32 %v220, %v221
    %272 = vadd.xlane.f32.xlu0 %v271
    %v273 = vpop.xlane.xlu0 %272
    %v274 = vadd.f32 %v222, %v223
    %275 = vadd.xlane.f32.xlu0 %v274
    %v276 = vpop.xlane.xlu0 %275
    %v277 = vadd.f32 %v224, %v225
    %278 = vadd.xlane.f32.xlu0 %v277
    %v279 = vpop.xlane.xlu0 %278
    %v280 = vadd.f32 %v226, %v227
    %281 = vadd.xlane.f32.xlu0 %v280
    %v282 = vpop.xlane.xlu0 %281
    %v283 = vadd.f32 %v228, %v229
    %284 = vadd.xlane.f32.xlu0 %v283
    %v285 = vpop.xlane.xlu0 %284
    %v286 = vadd.f32 %v230, %v231
    %287 = vadd.xlane.f32.xlu0 %v286
    %v288 = vpop.xlane.xlu0 %287
    %v289 = vadd.f32 %v232, %v233
    %290 = vadd.xlane.f32.xlu0 %v289
    %v291 = vpop.xlane.xlu0 %290
    %v292 = vadd.f32 %v234, %v235
    %293 = vadd.xlane.f32.xlu0 %v292
    %v294 = vpop.xlane.xlu0 %293
    %v295 = vadd.f32 %v236, %v237
    %296 = vadd.xlane.f32.xlu0 %v295
    %v297 = vpop.xlane.xlu0 %296
    %v298 = vadd.f32 %v238, %v239
    %299 = vadd.xlane.f32.xlu0 %v298
    %v300 = vpop.xlane.xlu0 %299
    %v301 = vadd.f32 %v240, %v241
    %302 = vadd.xlane.f32.xlu0 %v301
    %v303 = vpop.xlane.xlu0 %302
    %v304 = vadd.f32 %v242, %v243
    %305 = vadd.xlane.f32.xlu0 %v304
    %v306 = vpop.xlane.xlu0 %305
    %v307 = vadd.f32 %v244, %v245
    %308 = vadd.xlane.f32.xlu0 %v307
    %v309 = vpop.xlane.xlu0 %308
    %v310 = vadd.f32 %v246, %v247
    %311 = vadd.xlane.f32.xlu0 %v310
    %v312 = vpop.xlane.xlu0 %311
    %v313 = vadd.f32 %v248, %v249
    %314 = vadd.xlane.f32.xlu0 %v313
    %v315 = vpop.xlane.xlu0 %314
    %v316 = vadd.f32 %v250, %v251
    %317 = vadd.xlane.f32.xlu0 %v316
    %v318 = vpop.xlane.xlu0 %317
    %v319 = vadd.f32 %v252, %v253
    %320 = vadd.xlane.f32.xlu0 %v319
    %v321 = vpop.xlane.xlu0 %320
    %v322 = vadd.f32 %v254, %v255
    %323 = vadd.xlane.f32.xlu0 %v322
    %v324 = vpop.xlane.xlu0 %323
    %v325 = vadd.f32 %v256, %v257
    %326 = vadd.xlane.f32.xlu0 %v325
    %v327 = vpop.xlane.xlu0 %326
    %v328 = vadd.f32 %v258, %v259
    %329 = vadd.xlane.f32.xlu0 %v328
    %v330 = vpop.xlane.xlu0 %329
    %v331 = vadd.f32 %v260, %v261
    %332 = vadd.xlane.f32.xlu0 %v331
    %v333 = vpop.xlane.xlu0 %332
    %v334 = vmul.f32 %v264, %v141
    %v335 = vmul.f32 %v267, %v141
    %v336 = vmul.f32 %v270, %v141
    %v337 = vmul.f32 %v273, %v141
    %v338 = vmul.f32 %v276, %v141
    %v339 = vmul.f32 %v279, %v141
    %v340 = vmul.f32 %v282, %v141
    %v341 = vmul.f32 %v285, %v141
    %v342 = vmul.f32 %v288, %v141
    %v343 = vmul.f32 %v291, %v141
    %v344 = vmul.f32 %v294, %v141
    %v345 = vmul.f32 %v297, %v141
    %v346 = vmul.f32 %v300, %v141
    %v347 = vmul.f32 %v303, %v141
    %v348 = vmul.f32 %v306, %v141
    %v349 = vmul.f32 %v309, %v141
    %v350 = vmul.f32 %v312, %v141
    %v351 = vmul.f32 %v315, %v141
    %v352 = vmul.f32 %v318, %v141
    %v353 = vmul.f32 %v321, %v141
    %v354 = vmul.f32 %v324, %v141
    %v355 = vmul.f32 %v327, %v141
    %v356 = vmul.f32 %v330, %v141
    %v357 = vmul.f32 %v333, %v141
    %v358 = vld [vmem:[%s1] sm:$0xff]
    %v359 = vld [vmem:[%s1 + $0x8] sm:$0xff]
    %v360 = vld [vmem:[%s1 + $0x10] sm:$0xff]
    %v361 = vld [vmem:[%s1 + $0x18] sm:$0xff]
    %v362 = vld [vmem:[%s1 + $0x20] sm:$0xff]
    %v363 = vld [vmem:[%s1 + $0x28] sm:$0xff]
    %v364 = vld [vmem:[%s1 + $0x30] sm:$0xff]
    %v365 = vld [vmem:[%s1 + $0x38] sm:$0xff]
    %v366 = vld [vmem:[%s1 + $0x40] sm:$0xff]
    %v367 = vld [vmem:[%s1 + $0x48] sm:$0xff]
    %v368 = vld [vmem:[%s1 + $0x50] sm:$0xff]
    %v369 = vld [vmem:[%s1 + $0x58] sm:$0xff]
    %v370 = vld [vmem:[%s1 + $0x60] sm:$0xff]
    %v371 = vld [vmem:[%s1 + $0x68] sm:$0xff]
    %v372 = vld [vmem:[%s1 + $0x70] sm:$0xff]
    %v373 = vld [vmem:[%s1 + $0x78] sm:$0xff]
    %v374 = vld [vmem:[%s1 + $0x80] sm:$0xff]
    %v375 = vld [vmem:[%s1 + $0x88] sm:$0xff]
    %v376 = vld [vmem:[%s1 + $0x90] sm:$0xff]
    %v377 = vld [vmem:[%s1 + $0x98] sm:$0xff]
    %v378 = vld [vmem:[%s1 + $0xa0] sm:$0xff]
    %v379 = vld [vmem:[%s1 + $0xa8] sm:$0xff]
    %v380 = vld [vmem:[%s1 + $0xb0] sm:$0xff]
    %v381 = vld [vmem:[%s1 + $0xb8] sm:$0xff]
    %v382 = vadd.f32 %v334, 1e-05
    %v383 = vadd.f32 %v335, 1e-05
    %v384 = vadd.f32 %v336, 1e-05
    %v385 = vadd.f32 %v337, 1e-05
    %v386 = vadd.f32 %v338, 1e-05
    %v387 = vadd.f32 %v339, 1e-05
    %v388 = vadd.f32 %v340, 1e-05
    %v389 = vadd.f32 %v341, 1e-05
    %v390 = vadd.f32 %v342, 1e-05
    %v391 = vadd.f32 %v343, 1e-05
    %v392 = vadd.f32 %v344, 1e-05
    %v393 = vadd.f32 %v345, 1e-05
    %v394 = vadd.f32 %v346, 1e-05
    %v395 = vadd.f32 %v347, 1e-05
    %v396 = vadd.f32 %v348, 1e-05
    %v397 = vadd.f32 %v349, 1e-05
    %v398 = vadd.f32 %v350, 1e-05
    %v399 = vadd.f32 %v351, 1e-05
    %v400 = vadd.f32 %v352, 1e-05
    %v401 = vadd.f32 %v353, 1e-05
    %v402 = vadd.f32 %v354, 1e-05
    %v403 = vadd.f32 %v355, 1e-05
    %v404 = vadd.f32 %v356, 1e-05
    %v405 = vadd.f32 %v357, 1e-05
    %v406 = vrsqrt.pop %v382
    %v407 = vmul.f32 %v406, %v382
    %v408 = vmul.f32 %v407, %v406
    %v409 = vmul.f32 0.5, %v408
    %v410 = vsub.f32 1.5, %v409
    %v411 = vmul.f32 %v406, %v410
    %vm412 = vweird.f32 %v382
    %vm413 = vweird.f32 %v406
    %vm414 = vmor %vm412, %vm413
    %v415 = vsel %vm414, %v406, %v411
    %v416 = vrsqrt.pop %v383
    %v417 = vmul.f32 %v416, %v383
    %v418 = vmul.f32 %v417, %v416
    %v419 = vmul.f32 0.5, %v418
    %v420 = vsub.f32 1.5, %v419
    %v421 = vmul.f32 %v416, %v420
    %vm422 = vweird.f32 %v383
    %vm423 = vweird.f32 %v416
    %vm424 = vmor %vm422, %vm423
    %v425 = vsel %vm424, %v416, %v421
    %v426 = vrsqrt.pop %v384
    %v427 = vmul.f32 %v426, %v384
    %v428 = vmul.f32 %v427, %v426
    %v429 = vmul.f32 0.5, %v428
    %v430 = vsub.f32 1.5, %v429
    %v431 = vmul.f32 %v426, %v430
    %vm432 = vweird.f32 %v384
    %vm433 = vweird.f32 %v426
    %vm434 = vmor %vm432, %vm433
    %v435 = vsel %vm434, %v426, %v431
    %v436 = vrsqrt.pop %v385
    %v437 = vmul.f32 %v436, %v385
    %v438 = vmul.f32 %v437, %v436
    %v439 = vmul.f32 0.5, %v438
    %v440 = vsub.f32 1.5, %v439
    %v441 = vmul.f32 %v436, %v440
    %vm442 = vweird.f32 %v385
    %vm443 = vweird.f32 %v436
    %vm444 = vmor %vm442, %vm443
    %v445 = vsel %vm444, %v436, %v441
    %v446 = vrsqrt.pop %v386
    %v447 = vmul.f32 %v446, %v386
    %v448 = vmul.f32 %v447, %v446
    %v449 = vmul.f32 0.5, %v448
    %v450 = vsub.f32 1.5, %v449
    %v451 = vmul.f32 %v446, %v450
    %vm452 = vweird.f32 %v386
    %vm453 = vweird.f32 %v446
    %vm454 = vmor %vm452, %vm453
    %v455 = vsel %vm454, %v446, %v451
    %v456 = vrsqrt.pop %v387
    %v457 = vmul.f32 %v456, %v387
    %v458 = vmul.f32 %v457, %v456
    %v459 = vmul.f32 0.5, %v458
    %v460 = vsub.f32 1.5, %v459
    %v461 = vmul.f32 %v456, %v460
    %vm462 = vweird.f32 %v387
    %vm463 = vweird.f32 %v456
    %vm464 = vmor %vm462, %vm463
    %v465 = vsel %vm464, %v456, %v461
    %v466 = vrsqrt.pop %v388
    %v467 = vmul.f32 %v466, %v388
    %v468 = vmul.f32 %v467, %v466
    %v469 = vmul.f32 0.5, %v468
    %v470 = vsub.f32 1.5, %v469
    %v471 = vmul.f32 %v466, %v470
    %vm472 = vweird.f32 %v388
    %vm473 = vweird.f32 %v466
    %vm474 = vmor %vm472, %vm473
    %v475 = vsel %vm474, %v466, %v471
    %v476 = vrsqrt.pop %v389
    %v477 = vmul.f32 %v476, %v389
    %v478 = vmul.f32 %v477, %v476
    %v479 = vmul.f32 0.5, %v478
    %v480 = vsub.f32 1.5, %v479
    %v481 = vmul.f32 %v476, %v480
    %vm482 = vweird.f32 %v389
    %vm483 = vweird.f32 %v476
    %vm484 = vmor %vm482, %vm483
    %v485 = vsel %vm484, %v476, %v481
    %v486 = vrsqrt.pop %v390
    %v487 = vmul.f32 %v486, %v390
    %v488 = vmul.f32 %v487, %v486
    %v489 = vmul.f32 0.5, %v488
    %v490 = vsub.f32 1.5, %v489
    %v491 = vmul.f32 %v486, %v490
    %vm492 = vweird.f32 %v390
    %vm493 = vweird.f32 %v486
    %vm494 = vmor %vm492, %vm493
    %v495 = vsel %vm494, %v486, %v491
    %v496 = vrsqrt.pop %v391
    %v497 = vmul.f32 %v496, %v391
    %v498 = vmul.f32 %v497, %v496
    %v499 = vmul.f32 0.5, %v498
    %v500 = vsub.f32 1.5, %v499
    %v501 = vmul.f32 %v496, %v500
    %vm502 = vweird.f32 %v391
    %vm503 = vweird.f32 %v496
    %vm504 = vmor %vm502, %vm503
    %v505 = vsel %vm504, %v496, %v501
    %v506 = vrsqrt.pop %v392
    %v507 = vmul.f32 %v506, %v392
    %v508 = vmul.f32 %v507, %v506
    %v509 = vmul.f32 0.5, %v508
    %v510 = vsub.f32 1.5, %v509
    %v511 = vmul.f32 %v506, %v510
    %vm512 = vweird.f32 %v392
    %vm513 = vweird.f32 %v506
    %vm514 = vmor %vm512, %vm513
    %v515 = vsel %vm514, %v506, %v511
    %v516 = vrsqrt.pop %v393
    %v517 = vmul.f32 %v516, %v393
    %v518 = vmul.f32 %v517, %v516
    %v519 = vmul.f32 0.5, %v518
    %v520 = vsub.f32 1.5, %v519
    %v521 = vmul.f32 %v516, %v520
    %vm522 = vweird.f32 %v393
    %vm523 = vweird.f32 %v516
    %vm524 = vmor %vm522, %vm523
    %v525 = vsel %vm524, %v516, %v521
    %v526 = vrsqrt.pop %v394
    %v527 = vmul.f32 %v526, %v394
    %v528 = vmul.f32 %v527, %v526
    %v529 = vmul.f32 0.5, %v528
    %v530 = vsub.f32 1.5, %v529
    %v531 = vmul.f32 %v526, %v530
    %vm532 = vweird.f32 %v394
    %vm533 = vweird.f32 %v526
    %vm534 = vmor %vm532, %vm533
    %v535 = vsel %vm534, %v526, %v531
    %v536 = vrsqrt.pop %v395
    %v537 = vmul.f32 %v536, %v395
    %v538 = vmul.f32 %v537, %v536
    %v539 = vmul.f32 0.5, %v538
    %v540 = vsub.f32 1.5, %v539
    %v541 = vmul.f32 %v536, %v540
    %vm542 = vweird.f32 %v395
    %vm543 = vweird.f32 %v536
    %vm544 = vmor %vm542, %vm543
    %v545 = vsel %vm544, %v536, %v541
    %v546 = vrsqrt.pop %v396
    %v547 = vmul.f32 %v546, %v396
    %v548 = vmul.f32 %v547, %v546
    %v549 = vmul.f32 0.5, %v548
    %v550 = vsub.f32 1.5, %v549
    %v551 = vmul.f32 %v546, %v550
    %vm552 = vweird.f32 %v396
    %vm553 = vweird.f32 %v546
    %vm554 = vmor %vm552, %vm553
    %v555 = vsel %vm554, %v546, %v551
    %v556 = vrsqrt.pop %v397
    %v557 = vmul.f32 %v556, %v397
    %v558 = vmul.f32 %v557, %v556
    %v559 = vmul.f32 0.5, %v558
    %v560 = vsub.f32 1.5, %v559
    %v561 = vmul.f32 %v556, %v560
    %vm562 = vweird.f32 %v397
    %vm563 = vweird.f32 %v556
    %vm564 = vmor %vm562, %vm563
    %v565 = vsel %vm564, %v556, %v561
    %v566 = vrsqrt.pop %v398
    %v567 = vmul.f32 %v566, %v398
    %v568 = vmul.f32 %v567, %v566
    %v569 = vmul.f32 0.5, %v568
    %v570 = vsub.f32 1.5, %v569
    %v571 = vmul.f32 %v566, %v570
    %vm572 = vweird.f32 %v398
    %vm573 = vweird.f32 %v566
    %vm574 = vmor %vm572, %vm573
    %v575 = vsel %vm574, %v566, %v571
    %v576 = vrsqrt.pop %v399
    %v577 = vmul.f32 %v576, %v399
    %v578 = vmul.f32 %v577, %v576
    %v579 = vmul.f32 0.5, %v578
    %v580 = vsub.f32 1.5, %v579
    %v581 = vmul.f32 %v576, %v580
    %vm582 = vweird.f32 %v399
    %vm583 = vweird.f32 %v576
    %vm584 = vmor %vm582, %vm583
    %v585 = vsel %vm584, %v576, %v581
    %v586 = vrsqrt.pop %v400
    %v587 = vmul.f32 %v586, %v400
    %v588 = vmul.f32 %v587, %v586
    %v589 = vmul.f32 0.5, %v588
    %v590 = vsub.f32 1.5, %v589
    %v591 = vmul.f32 %v586, %v590
    %vm592 = vweird.f32 %v400
    %vm593 = vweird.f32 %v586
    %vm594 = vmor %vm592, %vm593
    %v595 = vsel %vm594, %v586, %v591
    %v596 = vrsqrt.pop %v401
    %v597 = vmul.f32 %v596, %v401
    %v598 = vmul.f32 %v597, %v596
    %v599 = vmul.f32 0.5, %v598
    %v600 = vsub.f32 1.5, %v599
    %v601 = vmul.f32 %v596, %v600
    %vm602 = vweird.f32 %v401
    %vm603 = vweird.f32 %v596
    %vm604 = vmor %vm602, %vm603
    %v605 = vsel %vm604, %v596, %v601
    %v606 = vrsqrt.pop %v402
    %v607 = vmul.f32 %v606, %v402
    %v608 = vmul.f32 %v607, %v606
    %v609 = vmul.f32 0.5, %v608
    %v610 = vsub.f32 1.5, %v609
    %v611 = vmul.f32 %v606, %v610
    %vm612 = vweird.f32 %v402
    %vm613 = vweird.f32 %v606
    %vm614 = vmor %vm612, %vm613
    %v615 = vsel %vm614, %v606, %v611
    %v616 = vrsqrt.pop %v403
    %v617 = vmul.f32 %v616, %v403
    %v618 = vmul.f32 %v617, %v616
    %v619 = vmul.f32 0.5, %v618
    %v620 = vsub.f32 1.5, %v619
    %v621 = vmul.f32 %v616, %v620
    %vm622 = vweird.f32 %v403
    %vm623 = vweird.f32 %v616
    %vm624 = vmor %vm622, %vm623
    %v625 = vsel %vm624, %v616, %v621
    %v626 = vrsqrt.pop %v404
    %v627 = vmul.f32 %v626, %v404
    %v628 = vmul.f32 %v627, %v626
    %v629 = vmul.f32 0.5, %v628
    %v630 = vsub.f32 1.5, %v629
    %v631 = vmul.f32 %v626, %v630
    %vm632 = vweird.f32 %v404
    %vm633 = vweird.f32 %v626
    %vm634 = vmor %vm632, %vm633
    %v635 = vsel %vm634, %v626, %v631
    %v636 = vrsqrt.pop %v405
    %v637 = vmul.f32 %v636, %v405
    %v638 = vmul.f32 %v637, %v636
    %v639 = vmul.f32 0.5, %v638
    %v640 = vsub.f32 1.5, %v639
    %v641 = vmul.f32 %v636, %v640
    %vm642 = vweird.f32 %v405
    %vm643 = vweird.f32 %v636
    %vm644 = vmor %vm642, %vm643
    %v645 = vsel %vm644, %v636, %v641
    %v646 = vmul.f32 %v358, %v415
    %v647 = vmul.f32 %v359, %v425
    %v648 = vmul.f32 %v360, %v435
    %v649 = vmul.f32 %v361, %v445
    %v650 = vmul.f32 %v362, %v455
    %v651 = vmul.f32 %v363, %v465
    %v652 = vmul.f32 %v364, %v475
    %v653 = vmul.f32 %v365, %v485
    %v654 = vmul.f32 %v366, %v495
    %v655 = vmul.f32 %v367, %v505
    %v656 = vmul.f32 %v368, %v515
    %v657 = vmul.f32 %v369, %v525
    %v658 = vmul.f32 %v370, %v535
    %v659 = vmul.f32 %v371, %v545
    %v660 = vmul.f32 %v372, %v555
    %v661 = vmul.f32 %v373, %v565
    %v662 = vmul.f32 %v374, %v575
    %v663 = vmul.f32 %v375, %v585
    %v664 = vmul.f32 %v376, %v595
    %v665 = vmul.f32 %v377, %v605
    %v666 = vmul.f32 %v378, %v615
    %v667 = vmul.f32 %v379, %v625
    %v668 = vmul.f32 %v380, %v635
    %v669 = vmul.f32 %v381, %v645
    %v670 = vld [vmem:[%s2] sm:$0xff]
    %v671 = vld [vmem:[%s2 + $0x8] sm:$0xff]
    %v672 = vld [vmem:[%s2 + $0x10] sm:$0xff]
    %v673 = vld [vmem:[%s2 + $0x18] sm:$0xff]
    %v674 = vld [vmem:[%s2 + $0x20] sm:$0xff]
    %v675 = vld [vmem:[%s2 + $0x28] sm:$0xff]
    %v676 = vld [vmem:[%s2 + $0x30] sm:$0xff]
    %v677 = vld [vmem:[%s2 + $0x38] sm:$0xff]
    %v678 = vld [vmem:[%s2 + $0x40] sm:$0xff]
    %v679 = vld [vmem:[%s2 + $0x48] sm:$0xff]
    %v680 = vld [vmem:[%s2 + $0x50] sm:$0xff]
    %v681 = vld [vmem:[%s2 + $0x58] sm:$0xff]
    %v682 = vld [vmem:[%s2 + $0x60] sm:$0xff]
    %v683 = vld [vmem:[%s2 + $0x68] sm:$0xff]
    %v684 = vld [vmem:[%s2 + $0x70] sm:$0xff]
    %v685 = vld [vmem:[%s2 + $0x78] sm:$0xff]
    %v686 = vld [vmem:[%s2 + $0x80] sm:$0xff]
    %v687 = vld [vmem:[%s2 + $0x88] sm:$0xff]
    %v688 = vld [vmem:[%s2 + $0x90] sm:$0xff]
    %v689 = vld [vmem:[%s2 + $0x98] sm:$0xff]
    %v690 = vld [vmem:[%s2 + $0xa0] sm:$0xff]
    %v691 = vld [vmem:[%s2 + $0xa8] sm:$0xff]
    %v692 = vld [vmem:[%s2 + $0xb0] sm:$0xff]
    %v693 = vld [vmem:[%s2 + $0xb8] sm:$0xff]
    %v694 = vmul.f32 %v142, %v646
    %v695 = vmul.f32 %v143, %v647
    %v696 = vmul.f32 %v144, %v648
    %v697 = vmul.f32 %v145, %v649
    %v698 = vmul.f32 %v146, %v650
    %v699 = vmul.f32 %v147, %v651
    %v700 = vmul.f32 %v148, %v652
    %v701 = vmul.f32 %v149, %v653
    %v702 = vmul.f32 %v150, %v654
    %v703 = vmul.f32 %v151, %v655
    %v704 = vmul.f32 %v152, %v656
    %v705 = vmul.f32 %v153, %v657
    %v706 = vmul.f32 %v154, %v658
    %v707 = vmul.f32 %v155, %v659
    %v708 = vmul.f32 %v156, %v660
    %v709 = vmul.f32 %v157, %v661
    %v710 = vmul.f32 %v158, %v662
    %v711 = vmul.f32 %v159, %v663
    %v712 = vmul.f32 %v160, %v664
    %v713 = vmul.f32 %v161, %v665
    %v714 = vmul.f32 %v162, %v666
    %v715 = vmul.f32 %v163, %v667
    %v716 = vmul.f32 %v164, %v668
    %v717 = vmul.f32 %v165, %v669
    %v718 = vsub.f32 %v670, %v694
    %v719 = vsub.f32 %v671, %v695
    %v720 = vsub.f32 %v672, %v696
    %v721 = vsub.f32 %v673, %v697
    %v722 = vsub.f32 %v674, %v698
    %v723 = vsub.f32 %v675, %v699
    %v724 = vsub.f32 %v676, %v700
    %v725 = vsub.f32 %v677, %v701
    %v726 = vsub.f32 %v678, %v702
    %v727 = vsub.f32 %v679, %v703
    %v728 = vsub.f32 %v680, %v704
    %v729 = vsub.f32 %v681, %v705
    %v730 = vsub.f32 %v682, %v706
    %v731 = vsub.f32 %v683, %v707
    %v732 = vsub.f32 %v684, %v708
    %v733 = vsub.f32 %v685, %v709
    %v734 = vsub.f32 %v686, %v710
    %v735 = vsub.f32 %v687, %v711
    %v736 = vsub.f32 %v688, %v712
    %v737 = vsub.f32 %v689, %v713
    %v738 = vsub.f32 %v690, %v714
    %v739 = vsub.f32 %v691, %v715
    %v740 = vsub.f32 %v692, %v716
    %v741 = vsub.f32 %v693, %v717
    %743 = vset.pattern.permute.xlu0 0
    %744 = vperm.xlu0 %743, %v646
    %v745 = vpop.permute.xlu0 %744
    %748 = vset.pattern.permute.xlu0 0
    %749 = vperm.xlu0 %748, %v647
    %v750 = vpop.permute.xlu0 %749
    %753 = vset.pattern.permute.xlu0 0
    %754 = vperm.xlu0 %753, %v648
    %v755 = vpop.permute.xlu0 %754
    %758 = vset.pattern.permute.xlu0 0
    %759 = vperm.xlu0 %758, %v649
    %v760 = vpop.permute.xlu0 %759
    %763 = vset.pattern.permute.xlu0 0
    %764 = vperm.xlu0 %763, %v650
    %v765 = vpop.permute.xlu0 %764
    %768 = vset.pattern.permute.xlu0 0
    %769 = vperm.xlu0 %768, %v651
    %v770 = vpop.permute.xlu0 %769
    %773 = vset.pattern.permute.xlu0 0
    %774 = vperm.xlu0 %773, %v652
    %v775 = vpop.permute.xlu0 %774
    %778 = vset.pattern.permute.xlu0 0
    %779 = vperm.xlu0 %778, %v653
    %v780 = vpop.permute.xlu0 %779
    %783 = vset.pattern.permute.xlu0 0
    %784 = vperm.xlu0 %783, %v654
    %v785 = vpop.permute.xlu0 %784
    %788 = vset.pattern.permute.xlu0 0
    %789 = vperm.xlu0 %788, %v655
    %v790 = vpop.permute.xlu0 %789
    %793 = vset.pattern.permute.xlu0 0
    %794 = vperm.xlu0 %793, %v656
    %v795 = vpop.permute.xlu0 %794
    %798 = vset.pattern.permute.xlu0 0
    %799 = vperm.xlu0 %798, %v657
    %v800 = vpop.permute.xlu0 %799
    %803 = vset.pattern.permute.xlu0 0
    %804 = vperm.xlu0 %803, %v658
    %v805 = vpop.permute.xlu0 %804
    %808 = vset.pattern.permute.xlu0 0
    %809 = vperm.xlu0 %808, %v659
    %v810 = vpop.permute.xlu0 %809
    %813 = vset.pattern.permute.xlu0 0
    %814 = vperm.xlu0 %813, %v660
    %v815 = vpop.permute.xlu0 %814
    %818 = vset.pattern.permute.xlu0 0
    %819 = vperm.xlu0 %818, %v661
    %v820 = vpop.permute.xlu0 %819
    %823 = vset.pattern.permute.xlu0 0
    %824 = vperm.xlu0 %823, %v662
    %v825 = vpop.permute.xlu0 %824
    %828 = vset.pattern.permute.xlu0 0
    %829 = vperm.xlu0 %828, %v663
    %v830 = vpop.permute.xlu0 %829
    %833 = vset.pattern.permute.xlu0 0
    %834 = vperm.xlu0 %833, %v664
    %v835 = vpop.permute.xlu0 %834
    %838 = vset.pattern.permute.xlu0 0
    %839 = vperm.xlu0 %838, %v665
    %v840 = vpop.permute.xlu0 %839
    %843 = vset.pattern.permute.xlu0 0
    %844 = vperm.xlu0 %843, %v666
    %v845 = vpop.permute.xlu0 %844
    %848 = vset.pattern.permute.xlu0 0
    %849 = vperm.xlu0 %848, %v667
    %v850 = vpop.permute.xlu0 %849
    %853 = vset.pattern.permute.xlu0 0
    %854 = vperm.xlu0 %853, %v668
    %v855 = vpop.permute.xlu0 %854
    %858 = vset.pattern.permute.xlu0 0
    %859 = vperm.xlu0 %858, %v669
    %v860 = vpop.permute.xlu0 %859
    %v862 = vmul.f32 %v15, %v745
    %v863 = vmul.f32 %v16, %v745
    %v864 = vmul.f32 %v17, %v750
    %v865 = vmul.f32 %v18, %v750
    %v866 = vmul.f32 %v19, %v755
    %v867 = vmul.f32 %v20, %v755
    %v868 = vmul.f32 %v21, %v760
    %v869 = vmul.f32 %v22, %v760
    %v870 = vmul.f32 %v23, %v765
    %v871 = vmul.f32 %v24, %v765
    %v872 = vmul.f32 %v25, %v770
    %v873 = vmul.f32 %v26, %v770
    %v874 = vmul.f32 %v27, %v775
    %v875 = vmul.f32 %v28, %v775
    %v876 = vmul.f32 %v29, %v780
    %v877 = vmul.f32 %v30, %v780
    %v878 = vmul.f32 %v31, %v785
    %v879 = vmul.f32 %v32, %v785
    %v880 = vmul.f32 %v33, %v790
    %v881 = vmul.f32 %v34, %v790
    %v882 = vmul.f32 %v35, %v795
    %v883 = vmul.f32 %v36, %v795
    %v884 = vmul.f32 %v37, %v800
    %v885 = vmul.f32 %v38, %v800
    %v886 = vmul.f32 %v39, %v805
    %v887 = vmul.f32 %v40, %v805
    %v888 = vmul.f32 %v41, %v810
    %v889 = vmul.f32 %v42, %v810
    %v890 = vmul.f32 %v43, %v815
    %v891 = vmul.f32 %v44, %v815
    %v892 = vmul.f32 %v45, %v820
    %v893 = vmul.f32 %v46, %v820
    %v894 = vmul.f32 %v47, %v825
    %v895 = vmul.f32 %v48, %v825
    %v896 = vmul.f32 %v49, %v830
    %v897 = vmul.f32 %v50, %v830
    %v898 = vmul.f32 %v51, %v835
    %v899 = vmul.f32 %v52, %v835
    %v900 = vmul.f32 %v53, %v840
    %v901 = vmul.f32 %v54, %v840
    %v902 = vmul.f32 %v55, %v845
    %v903 = vmul.f32 %v56, %v845
    %v904 = vmul.f32 %v57, %v850
    %v905 = vmul.f32 %v58, %v850
    %v906 = vmul.f32 %v59, %v855
    %v907 = vmul.f32 %v60, %v855
    %v908 = vmul.f32 %v61, %v860
    %v909 = vmul.f32 %v62, %v860
    %911 = vset.pattern.permute.xlu0 0
    %912 = vperm.xlu0 %911, %v718
    %v913 = vpop.permute.xlu0 %912
    %916 = vset.pattern.permute.xlu0 0
    %917 = vperm.xlu0 %916, %v719
    %v918 = vpop.permute.xlu0 %917
    %921 = vset.pattern.permute.xlu0 0
    %922 = vperm.xlu0 %921, %v720
    %v923 = vpop.permute.xlu0 %922
    %926 = vset.pattern.permute.xlu0 0
    %927 = vperm.xlu0 %926, %v721
    %v928 = vpop.permute.xlu0 %927
    %931 = vset.pattern.permute.xlu0 0
    %932 = vperm.xlu0 %931, %v722
    %v933 = vpop.permute.xlu0 %932
    %936 = vset.pattern.permute.xlu0 0
    %937 = vperm.xlu0 %936, %v723
    %v938 = vpop.permute.xlu0 %937
    %941 = vset.pattern.permute.xlu0 0
    %942 = vperm.xlu0 %941, %v724
    %v943 = vpop.permute.xlu0 %942
    %946 = vset.pattern.permute.xlu0 0
    %947 = vperm.xlu0 %946, %v725
    %v948 = vpop.permute.xlu0 %947
    %951 = vset.pattern.permute.xlu0 0
    %952 = vperm.xlu0 %951, %v726
    %v953 = vpop.permute.xlu0 %952
    %956 = vset.pattern.permute.xlu0 0
    %957 = vperm.xlu0 %956, %v727
    %v958 = vpop.permute.xlu0 %957
    %961 = vset.pattern.permute.xlu0 0
    %962 = vperm.xlu0 %961, %v728
    %v963 = vpop.permute.xlu0 %962
    %966 = vset.pattern.permute.xlu0 0
    %967 = vperm.xlu0 %966, %v729
    %v968 = vpop.permute.xlu0 %967
    %971 = vset.pattern.permute.xlu0 0
    %972 = vperm.xlu0 %971, %v730
    %v973 = vpop.permute.xlu0 %972
    %976 = vset.pattern.permute.xlu0 0
    %977 = vperm.xlu0 %976, %v731
    %v978 = vpop.permute.xlu0 %977
    %981 = vset.pattern.permute.xlu0 0
    %982 = vperm.xlu0 %981, %v732
    %v983 = vpop.permute.xlu0 %982
    %986 = vset.pattern.permute.xlu0 0
    %987 = vperm.xlu0 %986, %v733
    %v988 = vpop.permute.xlu0 %987
    %991 = vset.pattern.permute.xlu0 0
    %992 = vperm.xlu0 %991, %v734
    %v993 = vpop.permute.xlu0 %992
    %996 = vset.pattern.permute.xlu0 0
    %997 = vperm.xlu0 %996, %v735
    %v998 = vpop.permute.xlu0 %997
    %1001 = vset.pattern.permute.xlu0 0
    %1002 = vperm.xlu0 %1001, %v736
    %v1003 = vpop.permute.xlu0 %1002
    %1006 = vset.pattern.permute.xlu0 0
    %1007 = vperm.xlu0 %1006, %v737
    %v1008 = vpop.permute.xlu0 %1007
    %1011 = vset.pattern.permute.xlu0 0
    %1012 = vperm.xlu0 %1011, %v738
    %v1013 = vpop.permute.xlu0 %1012
    %1016 = vset.pattern.permute.xlu0 0
    %1017 = vperm.xlu0 %1016, %v739
    %v1018 = vpop.permute.xlu0 %1017
    %1021 = vset.pattern.permute.xlu0 0
    %1022 = vperm.xlu0 %1021, %v740
    %v1023 = vpop.permute.xlu0 %1022
    %1026 = vset.pattern.permute.xlu0 0
    %1027 = vperm.xlu0 %1026, %v741
    %v1028 = vpop.permute.xlu0 %1027
    %v1030 = vadd.f32 %v862, %v913
    %v1031 = vadd.f32 %v863, %v913
    %v1032 = vadd.f32 %v864, %v918
    %v1033 = vadd.f32 %v865, %v918
    %v1034 = vadd.f32 %v866, %v923
    %v1035 = vadd.f32 %v867, %v923
    %v1036 = vadd.f32 %v868, %v928
    %v1037 = vadd.f32 %v869, %v928
    %v1038 = vadd.f32 %v870, %v933
    %v1039 = vadd.f32 %v871, %v933
    %v1040 = vadd.f32 %v872, %v938
    %v1041 = vadd.f32 %v873, %v938
    %v1042 = vadd.f32 %v874, %v943
    %v1043 = vadd.f32 %v875, %v943
    %v1044 = vadd.f32 %v876, %v948
    %v1045 = vadd.f32 %v877, %v948
    %v1046 = vadd.f32 %v878, %v953
    %v1047 = vadd.f32 %v879, %v953
    %v1048 = vadd.f32 %v880, %v958
    %v1049 = vadd.f32 %v881, %v958
    %v1050 = vadd.f32 %v882, %v963
    %v1051 = vadd.f32 %v883, %v963
    %v1052 = vadd.f32 %v884, %v968
    %v1053 = vadd.f32 %v885, %v968
    %v1054 = vadd.f32 %v886, %v973
    %v1055 = vadd.f32 %v887, %v973
    %v1056 = vadd.f32 %v888, %v978
    %v1057 = vadd.f32 %v889, %v978
    %v1058 = vadd.f32 %v890, %v983
    %v1059 = vadd.f32 %v891, %v983
    %v1060 = vadd.f32 %v892, %v988
    %v1061 = vadd.f32 %v893, %v988
    %v1062 = vadd.f32 %v894, %v993
    %v1063 = vadd.f32 %v895, %v993
    %v1064 = vadd.f32 %v896, %v998
    %v1065 = vadd.f32 %v897, %v998
    %v1066 = vadd.f32 %v898, %v1003
    %v1067 = vadd.f32 %v899, %v1003
    %v1068 = vadd.f32 %v900, %v1008
    %v1069 = vadd.f32 %v901, %v1008
    %v1070 = vadd.f32 %v902, %v1013
    %v1071 = vadd.f32 %v903, %v1013
    %v1072 = vadd.f32 %v904, %v1018
    %v1073 = vadd.f32 %v905, %v1018
    %v1074 = vadd.f32 %v906, %v1023
    %v1075 = vadd.f32 %v907, %v1023
    %v1076 = vadd.f32 %v908, %v1028
    %v1077 = vadd.f32 %v909, %v1028
    %v1078 = vmax.f32 %v1030, 0.0
    %v1079 = vmax.f32 %v1031, 0.0
    %v1080 = vmax.f32 %v1032, 0.0
    %v1081 = vmax.f32 %v1033, 0.0
    %v1082 = vmax.f32 %v1034, 0.0
    %v1083 = vmax.f32 %v1035, 0.0
    %v1084 = vmax.f32 %v1036, 0.0
    %v1085 = vmax.f32 %v1037, 0.0
    %v1086 = vmax.f32 %v1038, 0.0
    %v1087 = vmax.f32 %v1039, 0.0
    %v1088 = vmax.f32 %v1040, 0.0
    %v1089 = vmax.f32 %v1041, 0.0
    %v1090 = vmax.f32 %v1042, 0.0
    %v1091 = vmax.f32 %v1043, 0.0
    %v1092 = vmax.f32 %v1044, 0.0
    %v1093 = vmax.f32 %v1045, 0.0
    %v1094 = vmax.f32 %v1046, 0.0
    %v1095 = vmax.f32 %v1047, 0.0
    %v1096 = vmax.f32 %v1048, 0.0
    %v1097 = vmax.f32 %v1049, 0.0
    %v1098 = vmax.f32 %v1050, 0.0
    %v1099 = vmax.f32 %v1051, 0.0
    %v1100 = vmax.f32 %v1052, 0.0
    %v1101 = vmax.f32 %v1053, 0.0
    %v1102 = vmax.f32 %v1054, 0.0
    %v1103 = vmax.f32 %v1055, 0.0
    %v1104 = vmax.f32 %v1056, 0.0
    %v1105 = vmax.f32 %v1057, 0.0
    %v1106 = vmax.f32 %v1058, 0.0
    %v1107 = vmax.f32 %v1059, 0.0
    %v1108 = vmax.f32 %v1060, 0.0
    %v1109 = vmax.f32 %v1061, 0.0
    %v1110 = vmax.f32 %v1062, 0.0
    %v1111 = vmax.f32 %v1063, 0.0
    %v1112 = vmax.f32 %v1064, 0.0
    %v1113 = vmax.f32 %v1065, 0.0
    %v1114 = vmax.f32 %v1066, 0.0
    %v1115 = vmax.f32 %v1067, 0.0
    %v1116 = vmax.f32 %v1068, 0.0
    %v1117 = vmax.f32 %v1069, 0.0
    %v1118 = vmax.f32 %v1070, 0.0
    %v1119 = vmax.f32 %v1071, 0.0
    %v1120 = vmax.f32 %v1072, 0.0
    %v1121 = vmax.f32 %v1073, 0.0
    %v1122 = vmax.f32 %v1074, 0.0
    %v1123 = vmax.f32 %v1075, 0.0
    %v1124 = vmax.f32 %v1076, 0.0
    %v1125 = vmax.f32 %v1077, 0.0
    %1126 = vst [vmem:[#allocation2] sm:$0xff] %v1078
    %1127 = vst [vmem:[#allocation2 + $0x8] sm:$0xff] %v1079
    %1128 = vst [vmem:[#allocation2 + $0x10] sm:$0xff] %v1080
    %1129 = vst [vmem:[#allocation2 + $0x18] sm:$0xff] %v1081
    %1130 = vst [vmem:[#allocation2 + $0x20] sm:$0xff] %v1082
    %1131 = vst [vmem:[#allocation2 + $0x28] sm:$0xff] %v1083
    %1132 = vst [vmem:[#allocation2 + $0x30] sm:$0xff] %v1084
    %1133 = vst [vmem:[#allocation2 + $0x38] sm:$0xff] %v1085
    %1134 = vst [vmem:[#allocation2 + $0x40] sm:$0xff] %v1086
    %1135 = vst [vmem:[#allocation2 + $0x48] sm:$0xff] %v1087
    %1136 = vst [vmem:[#allocation2 + $0x50] sm:$0xff] %v1088
    %1137 = vst [vmem:[#allocation2 + $0x58] sm:$0xff] %v1089
    %1138 = vst [vmem:[#allocation2 + $0x60] sm:$0xff] %v1090
    %1139 = vst [vmem:[#allocation2 + $0x68] sm:$0xff] %v1091
    %1140 = vst [vmem:[#allocation2 + $0x70] sm:$0xff] %v1092
    %1141 = vst [vmem:[#allocation2 + $0x78] sm:$0xff] %v1093
    %1142 = vst [vmem:[#allocation2 + $0x80] sm:$0xff] %v1094
    %1143 = vst [vmem:[#allocation2 + $0x88] sm:$0xff] %v1095
    %1144 = vst [vmem:[#allocation2 + $0x90] sm:$0xff] %v1096
    %1145 = vst [vmem:[#allocation2 + $0x98] sm:$0xff] %v1097
    %1146 = vst [vmem:[#allocation2 + $0xa0] sm:$0xff] %v1098
    %1147 = vst [vmem:[#allocation2 + $0xa8] sm:$0xff] %v1099
    %1148 = vst [vmem:[#allocation2 + $0xb0] sm:$0xff] %v1100
    %1149 = vst [vmem:[#allocation2 + $0xb8] sm:$0xff] %v1101
    %1150 = vst [vmem:[#allocation2 + $0xc0] sm:$0xff] %v1102
    %1151 = vst [vmem:[#allocation2 + $0xc8] sm:$0xff] %v1103
    %1152 = vst [vmem:[#allocation2 + $0xd0] sm:$0xff] %v1104
    %1153 = vst [vmem:[#allocation2 + $0xd8] sm:$0xff] %v1105
    %1154 = vst [vmem:[#allocation2 + $0xe0] sm:$0xff] %v1106
    %1155 = vst [vmem:[#allocation2 + $0xe8] sm:$0xff] %v1107
    %1156 = vst [vmem:[#allocation2 + $0xf0] sm:$0xff] %v1108
    %1157 = vst [vmem:[#allocation2 + $0xf8] sm:$0xff] %v1109
    %1158 = vst [vmem:[#allocation2 + $0x100] sm:$0xff] %v1110
    %1159 = vst [vmem:[#allocation2 + $0x108] sm:$0xff] %v1111
    %1160 = vst [vmem:[#allocation2 + $0x110] sm:$0xff] %v1112
    %1161 = vst [vmem:[#allocation2 + $0x118] sm:$0xff] %v1113
    %1162 = vst [vmem:[#allocation2 + $0x120] sm:$0xff] %v1114
    %1163 = vst [vmem:[#allocation2 + $0x128] sm:$0xff] %v1115
    %1164 = vst [vmem:[#allocation2 + $0x130] sm:$0xff] %v1116
    %1165 = vst [vmem:[#allocation2 + $0x138] sm:$0xff] %v1117
    %1166 = vst [vmem:[#allocation2 + $0x140] sm:$0xff] %v1118
    %1167 = vst [vmem:[#allocation2 + $0x148] sm:$0xff] %v1119
    %1168 = vst [vmem:[#allocation2 + $0x150] sm:$0xff] %v1120
    %1169 = vst [vmem:[#allocation2 + $0x158] sm:$0xff] %v1121
    %1170 = vst [vmem:[#allocation2 + $0x160] sm:$0xff] %v1122
    %1171 = vst [vmem:[#allocation2 + $0x168] sm:$0xff] %v1123
    %1172 = vst [vmem:[#allocation2 + $0x170] sm:$0xff] %v1124
    %1173 = vst [vmem:[#allocation2 + $0x178] sm:$0xff] %v1125
    // Predicated region
    $region14: #{tpu_custom_call.1} parent=1 // pred_check
      _
    $region15: #{tpu_custom_call.1} parent=1 // pred_check_branch
      %1175 = sbr.rel (0) target = $region17
    $region16: #{tpu_custom_call.1} parent=1 // pred_region
      %1177 = vsyncadd [#allocation3], 0
      %s1178 = sshll.u32 [#allocation2], 4
      %s1179 = int_to_ptr.vmem [resolvable:$true] %s1178
      %s1180 = sshll.u32 %s3, 4
      %s1181 = int_to_ptr.hbm [resolvable:$true] %s1180
      %1186 = dma.vmem_to_hbm [thread:$0]  %s1179, 6144, %s1181, [#allocation3], 256, 256, 16
    $region17: #{tpu_custom_call.1} parent=1 // pred_fallthru
      _
    // Predicated region
    $region18: #{tpu_custom_call.1} parent=1 // pred_check
      _
    $region19: #{tpu_custom_call.1} parent=1 // pred_check_branch
      %1188 = sbr.rel (0) target = $region21
    $region20: #{tpu_custom_call.1} parent=1 // pred_region
      %1190 = dma.done [#allocation3], 6144
    $region21: #{tpu_custom_call.1} parent=1 // pred_fallthru
      _
    %1191 = vsyncpa [#allocation3], 1

</llo_original>
